<compile_context>
chip_gen: v7x
topology: tpu7x:2x2x1
jax: 0.10.0
libtpu: 0.0.40
codegen_flags: <defaults>
</compile_context>

<pallas_src>
import jax
import jax.numpy as jnp
from jax import lax
from jax.experimental import pallas as pl
from jax.experimental.pallas import tpu as pltpu


def _linear_kernel(x_ref, w_ref, b_ref, o_ref):
    # x_ref: (tm, K)   w_ref: (N, K) torch layout   b_ref: (1, N)   o_ref: (tm, N)
    acc = lax.dot_general(
        x_ref[...], w_ref[...],
        dimension_numbers=(((1,), (1,)), ((), ())),   # contract K with K => (tm, N)
        preferred_element_type=jnp.float32,
    )
    o_ref[...] = (acc + b_ref[...]).astype(o_ref.dtype)


@jax.jit
def logistic_regression_forward(x, weight, bias):
    """torch nn.Linear semantics: y = x @ weight.T + bias.

    x:      (B, num_feature)
    weight: (output_size, num_feature)   (torch layout, used as-is)
    bias:   (output_size,)
    """
    B, K = x.shape
    N = weight.shape[0]
    bias2d = bias.reshape(1, N)

    # Batch tile: full extent for small batches (single grid step), otherwise a
    # 512-row tile (multiple of 8 sublanes) with a ragged last block via cdiv.
    if B <= 512:
        tm = B
    else:
        tm = 512

        def _vmem_bytes(t):
            # double-buffered x tile + double-buffered out tile + resident W, b
            return (2 * t * K + 2 * t * N) * 4 + (N * K + N) * 4

        while tm > 8 and _vmem_bytes(tm) > 12 * 1024 * 1024:
            tm //= 2

    grid = (pl.cdiv(B, tm),)

    out = pl.pallas_call(
        _linear_kernel,
        out_shape=jax.ShapeDtypeStruct((B, N), x.dtype),
        grid=grid,
        in_specs=[
            pl.BlockSpec((tm, K), lambda i: (i, 0)),   # x tile (K full-extent)
            pl.BlockSpec((N, K), lambda i: (0, 0)),    # weight resident, torch layout
            pl.BlockSpec((1, N), lambda i: (0, 0)),    # bias resident
        ],
        out_specs=pl.BlockSpec((tm, N), lambda i: (i, 0)),
        compiler_params=pltpu.CompilerParams(
            dimension_semantics=("parallel",)),
    )(x, weight, bias2d)

    return out


if __name__ == "__main__":
    key = jax.random.PRNGKey(0)
    kx, kw, kb = jax.random.split(key, 3)

    # Small shapes implied by the module's forward: x is (batch, num_feature).
    B, num_feature, output_size = 8, 64, 10
    x = jax.random.normal(kx, (B, num_feature), jnp.float32)
    weight = 0.1 * jax.random.normal(kw, (output_size, num_feature), jnp.float32)
    bias = 0.1 * jax.random.normal(kb, (output_size,), jnp.float32)

    out = logistic_regression_forward(x, weight, bias)
    jax.block_until_ready(out)

    ref = x @ weight.T + bias
    assert out.shape == (B, output_size) and out.dtype == jnp.float32
    assert jnp.allclose(out, ref, atol=1e-5, rtol=1e-5), float(jnp.max(jnp.abs(out - ref)))
    print("KERNEL_OK")
</pallas_src>

<mosaic_0001>
module attributes {stable_mosaic.version = 11 : i64} {
  func.func @_linear_kernel(%arg0: i32, %arg1: memref<8x64xf32, #tpu.memory_space<vmem>>, %arg2: memref<10x64xf32, #tpu.memory_space<vmem>>, %arg3: memref<1x10xf32, #tpu.memory_space<vmem>>, %arg4: memref<8x10xf32, #tpu.memory_space<vmem>>) attributes {dimension_semantics = [#tpu.dimension_semantics<parallel>], iteration_bounds = array<i64: 1>, scalar_prefetch = 0 : i64, scratch_operands = 0 : i64, tpu.core_type = #tpu.core_type<tc>, window_params = [{transform_indices = @transform_0, window_bounds = array<i64: 8, 64>}, {pipeline_mode = #tpu.pipeline_mode<synchronous>, transform_indices = @transform_1, window_bounds = array<i64: 10, 64>}, {pipeline_mode = #tpu.pipeline_mode<synchronous>, transform_indices = @transform_2, window_bounds = array<i64: 1, 10>}, {transform_indices = @transform_3, window_bounds = array<i64: 8, 10>}]} {
    %c0 = arith.constant 0 : index
    %c0_0 = arith.constant 0 : index
    %0 = vector.load %arg1[%c0, %c0_0] : memref<8x64xf32, #tpu.memory_space<vmem>>, vector<8x64xf32>
    %c0_1 = arith.constant 0 : index
    %c0_2 = arith.constant 0 : index
    %1 = vector.load %arg2[%c0_1, %c0_2] : memref<10x64xf32, #tpu.memory_space<vmem>>, vector<10x64xf32>
    %cst = arith.constant dense<0.000000e+00> : vector<8x10xf32>
    %2 = tpu.matmul %0, %1, %cst {dimension_numbers = #tpu.dot_dimension_numbers<[1], [1], [0], [0], [0, 0, 1, 0], [], []>} : vector<8x64xf32>, vector<10x64xf32>, vector<8x10xf32> -> vector<8x10xf32>
    %c0_3 = arith.constant 0 : index
    %c0_4 = arith.constant 0 : index
    %3 = vector.load %arg3[%c0_3, %c0_4] : memref<1x10xf32, #tpu.memory_space<vmem>>, vector<1x10xf32>
    %4 = vector.broadcast %3 : vector<1x10xf32> to vector<8x10xf32>
    %5 = arith.addf %2, %4 : vector<8x10xf32>
    %c0_5 = arith.constant 0 : index
    %c0_6 = arith.constant 0 : index
    %6 = vector.load %arg4[%c0_5, %c0_6] : memref<8x10xf32, #tpu.memory_space<vmem>>, vector<8x10xf32>
    tpu.vector_store %arg4[%c0_5, %c0_6], %5 {strides = array<i32>} : memref<8x10xf32, #tpu.memory_space<vmem>>, vector<8x10xf32>,
    return
  }
  func.func @transform_0(%arg0: i32) -> (i32, i32) {
    %c0_i32 = arith.constant 0 : i32
    %c0_i32_0 = arith.constant 0 : i32
    return %arg0, %c0_i32 : i32, i32
  }
  func.func @transform_1(%arg0: i32) -> (i32, i32) {
    %c0_i32 = arith.constant 0 : i32
    %c0_i32_0 = arith.constant 0 : i32
    %c0_i32_1 = arith.constant 0 : i32
    return %c0_i32, %c0_i32_0 : i32, i32
  }
  func.func @transform_2(%arg0: i32) -> (i32, i32) {
    %c0_i32 = arith.constant 0 : i32
    %c0_i32_0 = arith.constant 0 : i32
    %c0_i32_1 = arith.constant 0 : i32
    return %c0_i32, %c0_i32_0 : i32, i32
  }
  func.func @transform_3(%arg0: i32) -> (i32, i32) {
    %c0_i32 = arith.constant 0 : i32
    %c0_i32_0 = arith.constant 0 : i32
    return %arg0, %c0_i32 : i32, i32
  }
}

</mosaic_0001>

<llo_original>
// kernel: logistic_regression_forward.1
$region0: #{logistic_regression_forward.1}
  #allocation0 [shape = 'u32[]', space=smem, size = 0x4, offset = 0x4, fixed_abs, tag = 'smem constant byte address 0x4 - core index']
  #allocation1 [shape = 'u32[144,128]{1,0:T(1,128)}', space=vmem, size = 0x12000, scoped, tag = 'internal scratch']
  %s0 = inlined_call_operand.hbm [shape: f32[8,64], index: 0, kind: input, shape index: {}]
  %s1 = inlined_call_operand.hbm [shape: f32[10,64], index: 1, kind: input, shape index: {}]
  %s2 = inlined_call_operand.vmem [shape: f32[1,10], index: 2, kind: input, shape index: {}]
  %s3 = inlined_call_operand.hbm [shape: f32[8,10], index: 3, kind: output, shape index: {}]
  %s4 = sld [smem:[#allocation0]]
  $region30: #{logistic_regression_forward.1} parent=0
    _
  %s6 = ssub.s32 1, %s4
  %s7 = scalar_select 0, %s6, %s4
  $region1: #{logistic_regression_forward.1} parent=0
    #allocation2 [shape = 'u8[4096]{0}', space=vmem, size = 0x1000, scoped, tag = 'input window, operand 0, single buffered']
    #allocation3 [shape = 's32[1]{0}', space=sflag, size = 0x4, scoped, tag = 'scoped memory for logistic_regression_forward.1']
    #allocation4 [shape = 's32[1]{0}', space=sflag, size = 0x4, scoped, tag = 'scoped memory for logistic_regression_forward.1']
    #allocation5 [shape = 'u8[8192]{0}', space=vmem, size = 0x2000, scoped, tag = 'input window, operand 1, single buffered']
    #allocation6 [shape = 's32[1]{0}', space=sflag, size = 0x4, scoped, tag = 'scoped memory for logistic_regression_forward.1']
    #allocation7 [shape = 'u8[4096]{0}', space=vmem, size = 0x1000, scoped, tag = 'output window, operand 0, single buffered']
    %8 = vsyncpa [#allocation3], 0
    %9 = vsyncpa [#allocation6], 0
    %10 = vsyncpa [#allocation4], 0
    // Predicated region
    $region2: #{logistic_regression_forward.1} parent=1 // pred_check
      _
    $region3: #{logistic_regression_forward.1} parent=1 // pred_check_branch
      %12 = sbr.rel (0) target = $region5
    $region4: #{logistic_regression_forward.1} parent=1 // pred_region
      %s14 = ssub.s32 128, 128
      %15 = vsyncadd [#allocation3], %s14
      %s17 = sshll.u32 [#allocation2], 4
      %s18 = int_to_ptr.vmem [resolvable:$true] %s17
      %20 = dma.hbm_to_vmem [thread:$0]  %s0, 128, %s18, [#allocation3]
    $region5: #{logistic_regression_forward.1} parent=1 // pred_fallthru
      _
    // Predicated region
    $region6: #{logistic_regression_forward.1} parent=1 // pred_check
      _
    $region7: #{logistic_regression_forward.1} parent=1 // pred_check_branch
      %22 = sbr.rel (0) target = $region9
    $region8: #{logistic_regression_forward.1} parent=1 // pred_region
      %s24 = ssub.s32 256, 256
      %25 = vsyncadd [#allocation6], %s24
      %s26 = sshll.u32 [#allocation5], 4
      %s27 = int_to_ptr.vmem [resolvable:$true] %s26
      %32 = dma.hbm_to_vmem [thread:$0]  %s1, 256, %s27, [#allocation6], 128, 128, 8
    $region9: #{logistic_regression_forward.1} parent=1 // pred_fallthru
      _
    // Predicated region
    $region10: #{logistic_regression_forward.1} parent=1 // pred_check
      _
    $region11: #{logistic_regression_forward.1} parent=1 // pred_check_branch
      %34 = sbr.rel (0) target = $region13
    $region12: #{logistic_regression_forward.1} parent=1 // pred_region
      _
    $region13: #{logistic_regression_forward.1} parent=1 // pred_fallthru
      _
    // Predicated region
    $region14: #{logistic_regression_forward.1} parent=1 // pred_check
      _
    $region15: #{logistic_regression_forward.1} parent=1 // pred_check_branch
      %36 = sbr.rel (0) target = $region17
    $region16: #{logistic_regression_forward.1} parent=1 // pred_region
      %37 = dma.done [#allocation3], 128
    $region17: #{logistic_regression_forward.1} parent=1 // pred_fallthru
      _
    // Predicated region
    $region18: #{logistic_regression_forward.1} parent=1 // pred_check
      _
    $region19: #{logistic_regression_forward.1} parent=1 // pred_check_branch
      %39 = sbr.rel (0) target = $region21
    $region20: #{logistic_regression_forward.1} parent=1 // pred_region
      %40 = dma.done [#allocation6], 256
    $region21: #{logistic_regression_forward.1} parent=1 // pred_fallthru
      _
    %v41 = vld [vmem:[#allocation2] sm:$0xff]
    %v42 = vld [vmem:[#allocation5] sm:$0xff]
    %v43 = vld [vmem:[#allocation5 + $0x8] sm:$0x3]
    %v44 = vld [vmem:[%s2] sm:$0x1]
    %v46 = vlaneseq
    %v47 = vshrl.u32 %v46, 7
    %v48 = vsub.s32 0, %v47
    %v49 = vrot.slane %v44, %v48
    %vm51 = vcmask 523264
    %v53 = vsel %vm51, %v41, 0
    %v56 = vsel %vm51, %v42, 0
    %v59 = vsel %vm51, %v43, 0
    %61 = vmatprep.subr.mxu0 0.0
    %62 = vmatpush1.xpose.msra.mxu0 %v56
    %63 = vmatprep.subr.mxu0 0.0
    %64 = vmatpush1.xpose.msra.mxu0 %v59
    %65 = vmatprep.subr.mxu0 0.0
    %66 = vmatpush1.xpose.msra.mxu0 0.0
    %67 = vmatprep.subr.mxu0 0.0
    %68 = vmatpush1.xpose.msra.mxu0 0.0
    %69 = vmatprep.subr.mxu0 0.0
    %70 = vmatpush1.xpose.msra.mxu0 0.0
    %71 = vmatprep.subr.mxu0 0.0
    %72 = vmatpush1.xpose.msra.mxu0 0.0
    %73 = vmatprep.subr.mxu0 0.0
    %74 = vmatpush1.xpose.msra.mxu0 0.0
    %75 = vmatprep.subr.mxu0 0.0
    %76 = vmatpush1.xpose.msra.mxu0 0.0
    %77 = vmatprep.subr.mxu0 0.0
    %78 = vmatpush1.xpose.msra.mxu0 0.0
    %79 = vmatprep.subr.mxu0 0.0
    %80 = vmatpush1.xpose.msra.mxu0 0.0
    %81 = vmatprep.subr.mxu0 0.0
    %82 = vmatpush1.xpose.msra.mxu0 0.0
    %83 = vmatprep.subr.mxu0 0.0
    %84 = vmatpush1.xpose.msra.mxu0 0.0
    %85 = vmatprep.subr.mxu0 0.0
    %86 = vmatpush1.xpose.msra.mxu0 0.0
    %87 = vmatprep.subr.mxu0 0.0
    %88 = vmatpush1.xpose.msra.mxu0 0.0
    %89 = vmatprep.subr.mxu0 0.0
    %90 = vmatpush1.xpose.msra.mxu0 0.0
    %91 = vmatprep.subr.mxu0 0.0
    %92 = vmatpush1.xpose.msra.mxu0 0.0
    %93 = vmatprep.subr.mxu0 0.0
    %94 = vmatpush1.xpose.msra.mxu0 0.0
    %95 = vmatprep.subr.mxu0 0.0
    %96 = vmatpush1.xpose.msra.mxu0 0.0
    %97 = vmatprep.subr.mxu0 0.0
    %98 = vmatpush1.xpose.msra.mxu0 0.0
    %99 = vmatprep.subr.mxu0 0.0
    %100 = vmatpush1.xpose.msra.mxu0 0.0
    %101 = vmatprep.subr.mxu0 0.0
    %102 = vmatpush1.xpose.msra.mxu0 0.0
    %103 = vmatprep.subr.mxu0 0.0
    %104 = vmatpush1.xpose.msra.mxu0 0.0
    %105 = vmatprep.subr.mxu0 0.0
    %106 = vmatpush1.xpose.msra.mxu0 0.0
    %107 = vmatprep.subr.mxu0 0.0
    %108 = vmatpush1.xpose.msra.mxu0 0.0
    %109 = vmatprep.subr.mxu0 0.0
    %110 = vmatpush1.xpose.msra.mxu0 0.0
    %111 = vmatprep.subr.mxu0 0.0
    %112 = vmatpush1.xpose.msra.mxu0 0.0
    %113 = vmatprep.subr.mxu0 0.0
    %114 = vmatpush1.xpose.msra.mxu0 0.0
    %115 = vmatprep.subr.mxu0 0.0
    %116 = vmatpush1.xpose.msra.mxu0 0.0
    %117 = vmatprep.subr.mxu0 0.0
    %118 = vmatpush1.xpose.msra.mxu0 0.0
    %119 = vmatprep.subr.mxu0 0.0
    %120 = vmatpush1.xpose.msra.mxu0 0.0
    %121 = vmatprep.subr.mxu0 0.0
    %122 = vmatpush1.xpose.msra.mxu0 0.0
    %123 = vmatprep.subr.mxu0 0.0
    %124 = vmatpush1.xpose.msra.mxu0 0.0
    %125 = vmatprep.mubr.f32.mxu0 0.0
    %126 = vmatmul.mubr.f32.gmra.mrb[0].mxu0 %v53
    %v127 = vpop.f32.mrb[0].mxu0
    %v128 = vadd.f32 %v49, %v127
    %v129 = vpop.f32.mrb[0].mxu0
    %130 = vdwg.mxu0
    %vm131 = vcmask 80896
    %132 = vst.msk [vmem:[#allocation7] sm:$0xff] %vm131, %v128
    // Predicated region
    $region22: #{logistic_regression_forward.1} parent=1 // pred_check
      _
    $region23: #{logistic_regression_forward.1} parent=1 // pred_check_branch
      %134 = sbr.rel (0) target = $region25
    $region24: #{logistic_regression_forward.1} parent=1 // pred_region
      %s136 = ssub.s32 128, 128
      %137 = vsyncadd [#allocation4], %s136
      %s139 = sshll.u32 [#allocation7], 4
      %s140 = int_to_ptr.vmem [resolvable:$true] %s139
      %142 = dma.vmem_to_hbm [thread:$0]  %s140, 128, %s3, [#allocation4]
    $region25: #{logistic_regression_forward.1} parent=1 // pred_fallthru
      _
    // Predicated region
    $region26: #{logistic_regression_forward.1} parent=1 // pred_check
      _
    $region27: #{logistic_regression_forward.1} parent=1 // pred_check_branch
      %144 = sbr.rel (0) target = $region29
    $region28: #{logistic_regression_forward.1} parent=1 // pred_region
      %145 = dma.done [#allocation4], 128
    $region29: #{logistic_regression_forward.1} parent=1 // pred_fallthru
      _
    %146 = vsyncpa [#allocation3], 1
    %147 = vsyncpa [#allocation6], 1
    %148 = vsyncpa [#allocation4], 1

</llo_original>
